<compile_context>
chip_gen: v5e
topology: v5e:2x2
jax: 0.10.0
libtpu: 0.0.40
codegen_flags: <defaults>
</compile_context>

<pallas_src>
import functools

import jax
import jax.numpy as jnp
from jax import lax
from jax.experimental import pallas as pl
from jax.experimental.pallas import tpu as pltpu


_LANE = 128  # lane-dense output slab width


def _vmem_spec():
    # Full-array block resident in VMEM (all shapes here are tiny; no grid).
    return pl.BlockSpec(memory_space=pltpu.MemorySpace.VMEM)


# ----------------------------- fused Pallas kernel -----------------------------

def _fused_forward_kernel(
    # data operands
    x_ref, adj_ref, sel_ref, mask_ref, ar_ref, op_ref,
    # parameters
    w_in_ref, b_in_ref, w_layers_ref, b_layers_ref,
    w_heads_ref, b_heads_ref, w_mlp2_ref, b_mlp2_ref,
    # output
    out_ref,
    *, num_layers, BV, B, T, C, M):
    f32 = jnp.float32
    bf16 = jnp.bfloat16

    # ---------------- GNN trunk (adjacency loaded once, kept resident) --------
    # TODO(synk): for non-toy N, tile the trunk over a (row-block, col-block)
    #             grid (reduction axis last, "parallel" row axis for v7x
    #             megacore) and stream adj via BlockSpec instead of keeping the
    #             dense N x N resident; re-derive VMEM budget per generation.
    adj = adj_ref[...]                                               # (N, N) bf16
    h = jnp.dot(x_ref[...], w_in_ref[...],
                preferred_element_type=f32) + b_in_ref[...]
    h = jnp.maximum(h, 0.0)                                          # (N, D) f32

    for l in range(num_layers):  # static unroll; D=32 tiles are tiny
        agg = jnp.dot(adj, h.astype(bf16), preferred_element_type=f32)
        z = jnp.dot(agg.astype(bf16), w_layers_ref[l],
                    preferred_element_type=f32) + b_layers_ref[l]
        h = jnp.maximum(z, 0.0)

    # -------- fused gather(G2T) + mean-pool: one stacked operator, one dot ----
    # TODO(synk): for large N replace the one-hot gather rows with a
    #             scalar-prefetch / manual-DMA row gather.
    sel = jnp.dot(sel_ref[...], h.astype(bf16),
                  preferred_element_type=f32)                        # (B*V+B, D)

    # -------- all heads (trace | loop | mlp1) in ONE matmul on stacked rows ---
    heads = jnp.dot(sel.astype(bf16), w_heads_ref[...],
                    preferred_element_type=f32) + b_heads_ref[...]   # (B*V+B, 2T+M)
    state_pre = heads[0:BV, 0:T]                                     # (B*V, T)
    state2d = jax.nn.sigmoid(state_pre) * mask_ref[...]              # (B*V, T)
    loop_logits = heads[BV:BV + B, T:2 * T]                          # (B, T)
    mlp_pre = heads[BV:BV + B, 2 * T:2 * T + M]                      # (B, M)

    # softmax over trace positions (exp on EUP, approx reciprocal on EUP)
    lmax = jnp.max(loop_logits, axis=-1, keepdims=True)
    e = jnp.exp(loop_logits - lmax)
    loop = e * pl.reciprocal(jnp.sum(e, axis=-1, keepdims=True), approx=True)

    # satisfiability MLP head
    hid = jnp.maximum(mlp_pre, 0.0)
    logits = jnp.dot(hid.astype(bf16), w_mlp2_ref[...],
                     preferred_element_type=f32) + b_mlp2_ref[...]   # (B, C)

    # ---------------- soft trace check (minmax) --------------------------------
    # soft atom / rhs selection as ONE stacked (2B, B*V) bf16 MXU pass
    ar = jnp.dot(ar_ref[...], state2d.astype(bf16),
                 preferred_element_type=f32)                         # (2B, T)
    atom_val = ar[0:B]
    right_val = ar[B:2 * B]
    op = op_ref[...]                                                 # (B, 3)
    and_v = jnp.minimum(atom_val, right_val)
    or_v = jnp.maximum(atom_val, right_val)
    not_v = 1.0 - atom_val
    mix = op[:, 0:1] * and_v + op[:, 1:2] * or_v + op[:, 2:3] * not_v  # (B, T)

    # suffix-min over the trace, then soft loop mixture.
    # TODO(synk): for max_trace_len >~ 32 replace this (B,T,T) masked min with
    #             an O(T log T) doubling scan (pltpu.roll); at T=8 it is noise.
    row = lax.broadcasted_iota(jnp.int32, (T, T), 0)
    col = lax.broadcasted_iota(jnp.int32, (T, T), 1)
    keep = col >= row
    masked = jnp.where(keep[None, :, :], mix[:, None, :], jnp.float32(1e30))
    suffix_min = jnp.min(masked, axis=-1)                            # (B, T)
    p_sv = jnp.sum(loop * suffix_min, axis=-1, keepdims=True)        # (B, 1)

    # -------- single unmasked, lane-dense (B*V, 128) store ---------------------
    rest_b = jnp.concatenate([loop, logits, p_sv], axis=1)           # (B, T+C+1)
    if BV > B:
        rest = jnp.concatenate(
            [rest_b, jnp.zeros((BV - B, T + C + 1), f32)], axis=0)   # (B*V, T+C+1)
    else:
        rest = rest_b
    pad = jnp.zeros((BV, _LANE - (2 * T + C + 1)), f32)
    out_ref[...] = jnp.concatenate([state2d, rest, pad], axis=1)


# ------------------------------ jitted forward glue ------------------------------

def _forward_impl(params, x, edge_index, G2T_index, example_mark, atom_mask,
                  op_chose, atom_chose, right_chose, *, max_trace_len):
    f32 = jnp.float32
    bf16 = jnp.bfloat16

    n = x.shape[0]
    B, V = atom_chose.shape
    BV = B * V
    T = max_trace_len
    L = params["W_layers"].shape[0]
    M = params["W_heads"].shape[1] - 2 * T
    C = params["W_mlp2"].shape[1]
    assert 2 * T + C + 1 <= _LANE

    # --- host-side glue (fused into the same jit program, one dispatch) -------
    # dense row-normalized adjacency with self loops.
    src, dst = edge_index[0], edge_index[1]
    adj = jnp.zeros((n, n), f32).at[dst, src].add(1.0) + jnp.eye(n, dtype=f32)
    adj = adj / jnp.sum(adj, axis=1, keepdims=True)

    # per-example mean-pooling operator (B, N)
    pool_m = (example_mark[None, :]
              == jnp.arange(B, dtype=example_mark.dtype)[:, None]).astype(f32)
    pool_m = pool_m / jnp.maximum(jnp.sum(pool_m, axis=-1, keepdims=True), 1.0)

    # variable-node gather operator (B*V, N), stacked with the pooling operator
    gather_m = jax.nn.one_hot(G2T_index.reshape(-1), n, dtype=f32)
    sel_ops = jnp.concatenate([gather_m, pool_m], axis=0).astype(bf16)  # (BV+B, N)

    # stacked block-diagonal soft-selection operators for the trace check
    eye_b = jnp.eye(B, dtype=f32)
    a_mat = (eye_b[:, :, None] * atom_chose[None, :, :].astype(f32)).reshape(B, BV)
    r_mat = (eye_b[:, :, None] * right_chose[None, :, :].astype(f32)).reshape(B, BV)
    ar_ops = jnp.concatenate([a_mat, r_mat], axis=0).astype(bf16)       # (2B, BV)

    mask2d = atom_mask.reshape(BV, 1).astype(f32)

    kernel = functools.partial(_fused_forward_kernel,
                               num_layers=L, BV=BV, B=B, T=T, C=C, M=M)
    slab = pl.pallas_call(
        kernel,
        out_shape=jax.ShapeDtypeStruct((BV, _LANE), f32),
        in_specs=[_vmem_spec()] * 14,
        out_specs=_vmem_spec(),
        compiler_params=pltpu.CompilerParams(
            # TODO(synk): re-derive per generation once inputs grow (keep
            #             <= ~56 MiB on v7x, up to ~100 MiB on v5e/v6e).
            vmem_limit_bytes=64 * 1024 * 1024),
    )(x.astype(bf16), adj.astype(bf16), sel_ops, mask2d, ar_ops,
      op_chose.astype(f32),
      params["W_in"], params["b_in"], params["W_layers"], params["b_layers"],
      params["W_heads"], params["b_heads"], params["W_mlp2"], params["b_mlp2"])

    # unpack the lane-dense slab (tiny static slices fused into the same program)
    state2d = slab[:, 0:T]                                             # (B*V, T)
    state_seq = jnp.transpose(state2d.reshape(B, V, T), (0, 2, 1))     # (B, T, V)
    loop = slab[0:B, T:2 * T]                                          # (B, T)
    logits_sc = slab[0:B, 2 * T:2 * T + C]                             # (B, C)
    p_sv = slab[0:B, 2 * T + C]                                        # (B,)
    return logits_sc, p_sv, state_seq, loop


# ---------------------------------- model wrapper ----------------------------------

def _kaiming_uniform(key, shape):
    # nn.init.kaiming_uniform_(p, a=sqrt(5)) -> bound = 1 / sqrt(fan_in)
    fan_in = shape[0]
    bound = 1.0 / jnp.sqrt(jnp.float32(fan_in))
    return jax.random.uniform(key, shape, jnp.float32, -bound, bound)


class SatVSCNetSCTGPallas:
    """JAX/Pallas port of SatVSCNet_SC_TG with a single fused TPU forward kernel."""

    def __init__(self, key, embed_dim=32, num_layers=3, node_embed_dim=32,
                 mlp_dim=32, num_classes=2, max_trace_len=8, in_channels=12,
                 soft_check_type="minmax"):
        # NOTE: keeping the module's small dims; padding embed_dim to 128 (or
        # packing graphs along the lane axis) is the right move if the trunk is
        # ever meant to be MXU-bound at scale.
        self.embed_dim = embed_dim
        self.num_layers = num_layers
        self.node_embed_dim = node_embed_dim
        self.mlp_dim = mlp_dim
        self.num_classes = num_classes
        self.max_trace_len = max_trace_len
        self.soft_check_type = soft_check_type

        f32 = jnp.float32
        bf16 = jnp.bfloat16
        ks = jax.random.split(key, 6 + num_layers)

        W_in = _kaiming_uniform(ks[0], (in_channels, embed_dim))
        b_in = jnp.zeros((1, embed_dim), f32)
        W_layers = jnp.stack([_kaiming_uniform(ks[1 + i], (embed_dim, embed_dim))
                              for i in range(num_layers)])
        b_layers = jnp.zeros((num_layers, 1, embed_dim), f32)
        W_embed = _kaiming_uniform(ks[1 + num_layers], (embed_dim, node_embed_dim))
        b_embed = jnp.zeros((1, node_embed_dim), f32)
        W_trace = _kaiming_uniform(ks[2 + num_layers], (node_embed_dim, max_trace_len))
        W_loop = _kaiming_uniform(ks[3 + num_layers], (node_embed_dim, max_trace_len))
        W_mlp1 = _kaiming_uniform(ks[4 + num_layers], (node_embed_dim, mlp_dim))
        b_mlp1 = jnp.zeros((1, mlp_dim), f32)
        W_mlp2 = _kaiming_uniform(ks[5 + num_layers], (mlp_dim, num_classes))
        b_mlp2 = jnp.zeros((1, num_classes), f32)

        # Fold the (purely linear) node-embedding projection into the heads and
        # concatenate trace / loop / mlp1 weights into a single head matrix.
        W_heads = jnp.concatenate(
            [W_embed @ W_trace, W_embed @ W_loop, W_embed @ W_mlp1], axis=1)
        b_heads = jnp.concatenate(
            [b_embed @ W_trace, b_embed @ W_loop, b_embed @ W_mlp1 + b_mlp1], axis=1)

        # matmul operands stored in bf16 (MXU inputs, f32 accumulation);
        # biases stay f32 (VPU adds).
        self.params = {
            "W_in": W_in.astype(bf16), "b_in": b_in,
            "W_layers": W_layers.astype(bf16), "b_layers": b_layers,
            "W_heads": W_heads.astype(bf16), "b_heads": b_heads,
            "W_mlp2": W_mlp2.astype(bf16), "b_mlp2": b_mlp2,
        }
        self._forward = jax.jit(
            functools.partial(_forward_impl, max_trace_len=max_trace_len))

    def forward(self, x_batch, edge_index_batch, u_index_batch,
                G2T_index_batch, example_mark_batch, atom_mask_batch,
                op_chose_batch, atom_chose_batch, right_chose_batch):
        # u_index_batch is accepted for interface parity but (as in the
        # reference forward) never used.
        del u_index_batch
        return self._forward(self.params, x_batch, edge_index_batch,
                             G2T_index_batch, example_mark_batch,
                             atom_mask_batch, op_chose_batch,
                             atom_chose_batch, right_chose_batch)


# ----------------------------------- main -----------------------------------

if __name__ == "__main__":
    key = jax.random.PRNGKey(0)
    k_model, k_x, k_e, k_g, k_op, k_at, k_rt = jax.random.split(key, 7)

    B, N, V, E = 2, 16, 4, 24          # batch, nodes, max_num_var, edges
    T = 8                              # max_trace_len

    model = SatVSCNetSCTGPallas(k_model, embed_dim=32, num_layers=3,
                                node_embed_dim=32, mlp_dim=32, num_classes=2,
                                max_trace_len=T, in_channels=12)

    x_batch = jax.random.normal(k_x, (N, 12), jnp.float32)
    edge_index_batch = jax.random.randint(k_e, (2, E), 0, N, jnp.int32)
    u_index_batch = jnp.zeros((B,), jnp.int32)          # unused by forward
    G2T_index_batch = jax.random.randint(k_g, (B, V), 0, N, jnp.int32)
    example_mark_batch = jnp.repeat(jnp.arange(B, dtype=jnp.int32), N // B)
    atom_mask_batch = jnp.ones((B, V), jnp.float32)
    op_chose_batch = jax.nn.softmax(jax.random.normal(k_op, (B, 3)), axis=-1)
    atom_chose_batch = jax.nn.softmax(jax.random.normal(k_at, (B, V)), axis=-1)
    right_chose_batch = jax.nn.softmax(jax.random.normal(k_rt, (B, V)), axis=-1)

    logits_sc, p_sv, state_seq, loop = model.forward(
        x_batch, edge_index_batch, u_index_batch, G2T_index_batch,
        example_mark_batch, atom_mask_batch, op_chose_batch,
        atom_chose_batch, right_chose_batch)

    jax.block_until_ready((logits_sc, p_sv, state_seq, loop))
    assert logits_sc.shape == (B, 2)
    assert p_sv.shape == (B,)
    assert state_seq.shape == (B, T, V)
    assert loop.shape == (B, T)
    assert bool(jnp.all(jnp.isfinite(logits_sc)))
    assert bool(jnp.all(jnp.isfinite(p_sv)))
    assert bool(jnp.all(jnp.isfinite(state_seq)))
    assert bool(jnp.all(jnp.isfinite(loop)))
    print("KERNEL_OK")
</pallas_src>

<mosaic_0001>
module attributes {stable_mosaic.version = 11 : i64} {
  func.func @_fused_forward_kernel(%arg0: memref<16x12xbf16, #tpu.memory_space<vmem>>, %arg1: memref<16x16xbf16, #tpu.memory_space<vmem>>, %arg2: memref<10x16xbf16, #tpu.memory_space<vmem>>, %arg3: memref<8x1xf32, #tpu.memory_space<vmem>>, %arg4: memref<4x8xbf16, #tpu.memory_space<vmem>>, %arg5: memref<2x3xf32, #tpu.memory_space<vmem>>, %arg6: memref<12x32xbf16, #tpu.memory_space<vmem>>, %arg7: memref<1x32xf32, #tpu.memory_space<vmem>>, %arg8: memref<3x32x32xbf16, #tpu.memory_space<vmem>>, %arg9: memref<3x1x32xf32, #tpu.memory_space<vmem>>, %arg10: memref<32x48xbf16, #tpu.memory_space<vmem>>, %arg11: memref<1x48xf32, #tpu.memory_space<vmem>>, %arg12: memref<32x2xbf16, #tpu.memory_space<vmem>>, %arg13: memref<1x2xf32, #tpu.memory_space<vmem>>, %arg14: memref<8x128xf32, #tpu.memory_space<vmem>>) attributes {dimension_semantics = [], scalar_prefetch = 0 : i64, scratch_operands = 0 : i64, tpu.core_type = #tpu.core_type<tc>} {
    %c0 = arith.constant 0 : index
    %c0_0 = arith.constant 0 : index
    %0 = vector.load %arg1[%c0, %c0_0] : memref<16x16xbf16, #tpu.memory_space<vmem>>, vector<16x16xbf16>
    %c0_1 = arith.constant 0 : index
    %c0_2 = arith.constant 0 : index
    %1 = vector.load %arg0[%c0_1, %c0_2] : memref<16x12xbf16, #tpu.memory_space<vmem>>, vector<16x12xbf16>
    %c0_3 = arith.constant 0 : index
    %c0_4 = arith.constant 0 : index
    %2 = vector.load %arg6[%c0_3, %c0_4] : memref<12x32xbf16, #tpu.memory_space<vmem>>, vector<12x32xbf16>
    %cst = arith.constant dense<0.000000e+00> : vector<16x32xf32>
    %3 = tpu.matmul %1, %2, %cst {dimension_numbers = #tpu.dot_dimension_numbers<[1], [0], [0], [1], [0, 0, 1, 1], [], []>} : vector<16x12xbf16>, vector<12x32xbf16>, vector<16x32xf32> -> vector<16x32xf32>
    %c0_5 = arith.constant 0 : index
    %c0_6 = arith.constant 0 : index
    %4 = vector.load %arg7[%c0_5, %c0_6] : memref<1x32xf32, #tpu.memory_space<vmem>>, vector<1x32xf32>
    %5 = vector.broadcast %4 : vector<1x32xf32> to vector<16x32xf32>
    %6 = arith.addf %3, %5 : vector<16x32xf32>
    %cst_7 = arith.constant 0.000000e+00 : f32
    %7 = vector.broadcast %cst_7 : f32 to vector<16x32xf32>
    %8 = arith.maximumf %6, %7 : vector<16x32xf32>
    %9 = arith.truncf %8 : vector<16x32xf32> to vector<16x32xbf16>
    %cst_8 = arith.constant dense<0.000000e+00> : vector<16x32xf32>
    %10 = tpu.matmul %0, %9, %cst_8 {dimension_numbers = #tpu.dot_dimension_numbers<[1], [0], [0], [1], [0, 0, 1, 1], [], []>} : vector<16x16xbf16>, vector<16x32xbf16>, vector<16x32xf32> -> vector<16x32xf32>
    %11 = arith.truncf %10 : vector<16x32xf32> to vector<16x32xbf16>
    %c0_9 = arith.constant 0 : index
    %c0_10 = arith.constant 0 : index
    %c0_11 = arith.constant 0 : index
    %12 = vector.load %arg8[%c0_9, %c0_10, %c0_11] : memref<3x32x32xbf16, #tpu.memory_space<vmem>>, vector<1x32x32xbf16>
    %13 = vector.shape_cast %12 : vector<1x32x32xbf16> to vector<32x32xbf16>
    %cst_12 = arith.constant dense<0.000000e+00> : vector<16x32xf32>
    %14 = tpu.matmul %11, %13, %cst_12 {dimension_numbers = #tpu.dot_dimension_numbers<[1], [0], [0], [1], [0, 0, 1, 1], [], []>} : vector<16x32xbf16>, vector<32x32xbf16>, vector<16x32xf32> -> vector<16x32xf32>
    %c0_13 = arith.constant 0 : index
    %c0_14 = arith.constant 0 : index
    %c0_15 = arith.constant 0 : index
    %15 = vector.load %arg9[%c0_13, %c0_14, %c0_15] : memref<3x1x32xf32, #tpu.memory_space<vmem>>, vector<1x1x32xf32>
    %16 = vector.shape_cast %15 : vector<1x1x32xf32> to vector<1x32xf32>
    %17 = vector.broadcast %16 : vector<1x32xf32> to vector<16x32xf32>
    %18 = arith.addf %14, %17 : vector<16x32xf32>
    %cst_16 = arith.constant 0.000000e+00 : f32
    %19 = vector.broadcast %cst_16 : f32 to vector<16x32xf32>
    %20 = arith.maximumf %18, %19 : vector<16x32xf32>
    %21 = arith.truncf %20 : vector<16x32xf32> to vector<16x32xbf16>
    %cst_17 = arith.constant dense<0.000000e+00> : vector<16x32xf32>
    %22 = tpu.matmul %0, %21, %cst_17 {dimension_numbers = #tpu.dot_dimension_numbers<[1], [0], [0], [1], [0, 0, 1, 1], [], []>} : vector<16x16xbf16>, vector<16x32xbf16>, vector<16x32xf32> -> vector<16x32xf32>
    %23 = arith.truncf %22 : vector<16x32xf32> to vector<16x32xbf16>
    %c1 = arith.constant 1 : index
    %c0_18 = arith.constant 0 : index
    %c0_19 = arith.constant 0 : index
    %24 = vector.load %arg8[%c1, %c0_18, %c0_19] : memref<3x32x32xbf16, #tpu.memory_space<vmem>>, vector<1x32x32xbf16>
    %25 = vector.shape_cast %24 : vector<1x32x32xbf16> to vector<32x32xbf16>
    %cst_20 = arith.constant dense<0.000000e+00> : vector<16x32xf32>
    %26 = tpu.matmul %23, %25, %cst_20 {dimension_numbers = #tpu.dot_dimension_numbers<[1], [0], [0], [1], [0, 0, 1, 1], [], []>} : vector<16x32xbf16>, vector<32x32xbf16>, vector<16x32xf32> -> vector<16x32xf32>
    %c1_21 = arith.constant 1 : index
    %c0_22 = arith.constant 0 : index
    %c0_23 = arith.constant 0 : index
    %27 = vector.load %arg9[%c1_21, %c0_22, %c0_23] : memref<3x1x32xf32, #tpu.memory_space<vmem>>, vector<1x1x32xf32>
    %28 = vector.shape_cast %27 : vector<1x1x32xf32> to vector<1x32xf32>
    %29 = vector.broadcast %28 : vector<1x32xf32> to vector<16x32xf32>
    %30 = arith.addf %26, %29 : vector<16x32xf32>
    %cst_24 = arith.constant 0.000000e+00 : f32
    %31 = vector.broadcast %cst_24 : f32 to vector<16x32xf32>
    %32 = arith.maximumf %30, %31 : vector<16x32xf32>
    %33 = arith.truncf %32 : vector<16x32xf32> to vector<16x32xbf16>
    %cst_25 = arith.constant dense<0.000000e+00> : vector<16x32xf32>
    %34 = tpu.matmul %0, %33, %cst_25 {dimension_numbers = #tpu.dot_dimension_numbers<[1], [0], [0], [1], [0, 0, 1, 1], [], []>} : vector<16x16xbf16>, vector<16x32xbf16>, vector<16x32xf32> -> vector<16x32xf32>
    %35 = arith.truncf %34 : vector<16x32xf32> to vector<16x32xbf16>
    %c2 = arith.constant 2 : index
    %c0_26 = arith.constant 0 : index
    %c0_27 = arith.constant 0 : index
    %36 = vector.load %arg8[%c2, %c0_26, %c0_27] : memref<3x32x32xbf16, #tpu.memory_space<vmem>>, vector<1x32x32xbf16>
    %37 = vector.shape_cast %36 : vector<1x32x32xbf16> to vector<32x32xbf16>
    %cst_28 = arith.constant dense<0.000000e+00> : vector<16x32xf32>
    %38 = tpu.matmul %35, %37, %cst_28 {dimension_numbers = #tpu.dot_dimension_numbers<[1], [0], [0], [1], [0, 0, 1, 1], [], []>} : vector<16x32xbf16>, vector<32x32xbf16>, vector<16x32xf32> -> vector<16x32xf32>
    %c2_29 = arith.constant 2 : index
    %c0_30 = arith.constant 0 : index
    %c0_31 = arith.constant 0 : index
    %39 = vector.load %arg9[%c2_29, %c0_30, %c0_31] : memref<3x1x32xf32, #tpu.memory_space<vmem>>, vector<1x1x32xf32>
    %40 = vector.shape_cast %39 : vector<1x1x32xf32> to vector<1x32xf32>
    %41 = vector.broadcast %40 : vector<1x32xf32> to vector<16x32xf32>
    %42 = arith.addf %38, %41 : vector<16x32xf32>
    %cst_32 = arith.constant 0.000000e+00 : f32
    %43 = vector.broadcast %cst_32 : f32 to vector<16x32xf32>
    %44 = arith.maximumf %42, %43 : vector<16x32xf32>
    %c0_33 = arith.constant 0 : index
    %c0_34 = arith.constant 0 : index
    %45 = vector.load %arg2[%c0_33, %c0_34] : memref<10x16xbf16, #tpu.memory_space<vmem>>, vector<10x16xbf16>
    %46 = arith.truncf %44 : vector<16x32xf32> to vector<16x32xbf16>
    %cst_35 = arith.constant dense<0.000000e+00> : vector<10x32xf32>
    %47 = tpu.matmul %45, %46, %cst_35 {dimension_numbers = #tpu.dot_dimension_numbers<[1], [0], [0], [1], [0, 0, 1, 1], [], []>} : vector<10x16xbf16>, vector<16x32xbf16>, vector<10x32xf32> -> vector<10x32xf32>
    %48 = arith.truncf %47 : vector<10x32xf32> to vector<10x32xbf16>
    %c0_36 = arith.constant 0 : index
    %c0_37 = arith.constant 0 : index
    %49 = vector.load %arg10[%c0_36, %c0_37] : memref<32x48xbf16, #tpu.memory_space<vmem>>, vector<32x48xbf16>
    %cst_38 = arith.constant dense<0.000000e+00> : vector<10x48xf32>
    %50 = tpu.matmul %48, %49, %cst_38 {dimension_numbers = #tpu.dot_dimension_numbers<[1], [0], [0], [1], [0, 0, 1, 1], [], []>} : vector<10x32xbf16>, vector<32x48xbf16>, vector<10x48xf32> -> vector<10x48xf32>
    %c0_39 = arith.constant 0 : index
    %c0_40 = arith.constant 0 : index
    %51 = vector.load %arg11[%c0_39, %c0_40] : memref<1x48xf32, #tpu.memory_space<vmem>>, vector<1x48xf32>
    %52 = vector.broadcast %51 : vector<1x48xf32> to vector<10x48xf32>
    %53 = arith.addf %50, %52 : vector<10x48xf32>
    %54 = vector.extract_strided_slice %53 {offsets = [0, 0], sizes = [8, 8], strides = [1, 1]} : vector<10x48xf32> to vector<8x8xf32>
    %55 = arith.negf %54 : vector<8x8xf32>
    %56 = math.exp %55 : vector<8x8xf32>
    %cst_41 = arith.constant 1.000000e+00 : f32
    %57 = vector.broadcast %cst_41 : f32 to vector<8x8xf32>
    %58 = arith.addf %57, %56 : vector<8x8xf32>
    %59 = arith.divf %57, %58 : vector<8x8xf32>
    %c0_42 = arith.constant 0 : index
    %c0_43 = arith.constant 0 : index
    %60 = vector.load %arg3[%c0_42, %c0_43] : memref<8x1xf32, #tpu.memory_space<vmem>>, vector<8x1xf32>
    %61 = vector.broadcast %60 : vector<8x1xf32> to vector<8x8xf32>
    %62 = arith.mulf %59, %61 : vector<8x8xf32>
    %63 = vector.extract_strided_slice %53 {offsets = [8, 8], sizes = [2, 8], strides = [1, 1]} : vector<10x48xf32> to vector<2x8xf32>
    %64 = vector.extract_strided_slice %53 {offsets = [8, 16], sizes = [2, 32], strides = [1, 1]} : vector<10x48xf32> to vector<2x32xf32>
    %cst_44 = arith.constant dense<0xFF800000> : vector<2xf32>
    %65 = vector.multi_reduction <maximumf>, %63, %cst_44 [1] : vector<2x8xf32> to vector<2xf32>
    %66 = vector.shape_cast %65 : vector<2xf32> to vector<2x1xf32>
    %67 = vector.broadcast %66 : vector<2x1xf32> to vector<2x8xf32>
    %68 = arith.subf %63, %67 : vector<2x8xf32>
    %69 = math.exp %68 : vector<2x8xf32>
    %cst_45 = arith.constant dense<0.000000e+00> : vector<2xf32>
    %70 = vector.multi_reduction <add>, %69, %cst_45 [1] : vector<2x8xf32> to vector<2xf32>
    %71 = vector.shape_cast %70 : vector<2xf32> to vector<2x1xf32>
    %72 = tpu.reciprocal %71 {approx = true} : vector<2x1xf32> -> vector<2x1xf32>
    %73 = vector.broadcast %72 : vector<2x1xf32> to vector<2x8xf32>
    %74 = arith.mulf %69, %73 : vector<2x8xf32>
    %cst_46 = arith.constant 0.000000e+00 : f32
    %75 = vector.broadcast %cst_46 : f32 to vector<2x32xf32>
    %76 = arith.maximumf %64, %75 : vector<2x32xf32>
    %77 = arith.truncf %76 : vector<2x32xf32> to vector<2x32xbf16>
    %c0_47 = arith.constant 0 : index
    %c0_48 = arith.constant 0 : index
    %78 = vector.load %arg12[%c0_47, %c0_48] : memref<32x2xbf16, #tpu.memory_space<vmem>>, vector<32x2xbf16>
    %cst_49 = arith.constant dense<0.000000e+00> : vector<2x2xf32>
    %79 = tpu.matmul %77, %78, %cst_49 {dimension_numbers = #tpu.dot_dimension_numbers<[1], [0], [0], [1], [0, 0, 1, 1], [], []>} : vector<2x32xbf16>, vector<32x2xbf16>, vector<2x2xf32> -> vector<2x2xf32>
    %c0_50 = arith.constant 0 : index
    %c0_51 = arith.constant 0 : index
    %80 = vector.load %arg13[%c0_50, %c0_51] : memref<1x2xf32, #tpu.memory_space<vmem>>, vector<1x2xf32>
    %81 = vector.broadcast %80 : vector<1x2xf32> to vector<2x2xf32>
    %82 = arith.addf %79, %81 : vector<2x2xf32>
    %c0_52 = arith.constant 0 : index
    %c0_53 = arith.constant 0 : index
    %83 = vector.load %arg4[%c0_52, %c0_53] : memref<4x8xbf16, #tpu.memory_space<vmem>>, vector<4x8xbf16>
    %84 = arith.truncf %62 : vector<8x8xf32> to vector<8x8xbf16>
    %cst_54 = arith.constant dense<0.000000e+00> : vector<4x8xf32>
    %85 = tpu.matmul %83, %84, %cst_54 {dimension_numbers = #tpu.dot_dimension_numbers<[1], [0], [0], [1], [0, 0, 1, 1], [], []>} : vector<4x8xbf16>, vector<8x8xbf16>, vector<4x8xf32> -> vector<4x8xf32>
    %86 = vector.extract_strided_slice %85 {offsets = [0, 0], sizes = [2, 8], strides = [1, 1]} : vector<4x8xf32> to vector<2x8xf32>
    %87 = vector.extract_strided_slice %85 {offsets = [2, 0], sizes = [2, 8], strides = [1, 1]} : vector<4x8xf32> to vector<2x8xf32>
    %c0_55 = arith.constant 0 : index
    %c0_56 = arith.constant 0 : index
    %88 = vector.load %arg5[%c0_55, %c0_56] : memref<2x3xf32, #tpu.memory_space<vmem>>, vector<2x3xf32>
    %89 = arith.minimumf %86, %87 : vector<2x8xf32>
    %90 = arith.maximumf %86, %87 : vector<2x8xf32>
    %cst_57 = arith.constant 1.000000e+00 : f32
    %91 = vector.broadcast %cst_57 : f32 to vector<2x8xf32>
    %92 = arith.subf %91, %86 : vector<2x8xf32>
    %93 = vector.extract_strided_slice %88 {offsets = [0, 0], sizes = [2, 1], strides = [1, 1]} : vector<2x3xf32> to vector<2x1xf32>
    %94 = vector.broadcast %93 : vector<2x1xf32> to vector<2x8xf32>
    %95 = arith.mulf %94, %89 : vector<2x8xf32>
    %96 = vector.extract_strided_slice %88 {offsets = [0, 1], sizes = [2, 1], strides = [1, 1]} : vector<2x3xf32> to vector<2x1xf32>
    %97 = vector.broadcast %96 : vector<2x1xf32> to vector<2x8xf32>
    %98 = arith.mulf %97, %90 : vector<2x8xf32>
    %99 = arith.addf %95, %98 : vector<2x8xf32>
    %100 = vector.extract_strided_slice %88 {offsets = [0, 2], sizes = [2, 1], strides = [1, 1]} : vector<2x3xf32> to vector<2x1xf32>
    %101 = vector.broadcast %100 : vector<2x1xf32> to vector<2x8xf32>
    %102 = arith.mulf %101, %92 : vector<2x8xf32>
    %103 = arith.addf %99, %102 : vector<2x8xf32>
    %104 = tpu.iota {dimensions = array<i32: 0>} : vector<8x8xi32>
    %105 = tpu.iota {dimensions = array<i32: 1>} : vector<8x8xi32>
    %106 = arith.cmpi sge, %105, %104 : vector<8x8xi32>
    %107 = vector.shape_cast %106 : vector<8x8xi1> to vector<1x8x8xi1>
    %108 = vector.shape_cast %103 : vector<2x8xf32> to vector<2x1x8xf32>
    %cst_58 = arith.constant 1.000000e+30 : f32
    %109 = vector.shape_cast %107 : vector<1x8x8xi1> to vector<1x8x8xi1>
    %110 = vector.broadcast %109 : vector<1x8x8xi1> to vector<2x8x8xi1>
    %111 = vector.shape_cast %108 : vector<2x1x8xf32> to vector<2x1x8xf32>
    %112 = vector.broadcast %111 : vector<2x1x8xf32> to vector<2x8x8xf32>
    %113 = vector.broadcast %cst_58 : f32 to vector<2x8x8xf32>
    %114 = arith.select %110, %112, %113 : vector<2x8x8xi1>, vector<2x8x8xf32>
    %cst_59 = arith.constant dense<0x7F800000> : vector<2x8xf32>
    %115 = vector.multi_reduction <minimumf>, %114, %cst_59 [2] : vector<2x8x8xf32> to vector<2x8xf32>
    %116 = arith.mulf %74, %115 : vector<2x8xf32>
    %cst_60 = arith.constant dense<0.000000e+00> : vector<2xf32>
    %117 = vector.multi_reduction <add>, %116, %cst_60 [1] : vector<2x8xf32> to vector<2xf32>
    %118 = vector.shape_cast %117 : vector<2xf32> to vector<2x1xf32>
    %119 = tpu.concatenate %74, %82, %118 in 1 : vector<2x8xf32>, vector<2x2xf32>, vector<2x1xf32> -> vector<2x11xf32>
    %cst_61 = arith.constant 0.000000e+00 : f32
    %120 = vector.broadcast %cst_61 : f32 to vector<6x11xf32>
    %121 = tpu.concatenate %119, %120 in 0 : vector<2x11xf32>, vector<6x11xf32> -> vector<8x11xf32>
    %cst_62 = arith.constant 0.000000e+00 : f32
    %122 = vector.broadcast %cst_62 : f32 to vector<8x109xf32>
    %123 = tpu.concatenate %62, %121, %122 in 1 : vector<8x8xf32>, vector<8x11xf32>, vector<8x109xf32> -> vector<8x128xf32>
    %c0_63 = arith.constant 0 : index
    %c0_64 = arith.constant 0 : index
    %124 = vector.load %arg14[%c0_63, %c0_64] : memref<8x128xf32, #tpu.memory_space<vmem>>, vector<8x128xf32>
    tpu.vector_store %arg14[%c0_63, %c0_64], %123 {strides = array<i32>} : memref<8x128xf32, #tpu.memory_space<vmem>>, vector<8x128xf32>,
    return
  }
}

</mosaic_0001>

<llo_original>
// kernel: eq.1
$region0: #{eq.1}
  %s0 = inlined_call_operand.vmem [shape: s32[2,4], index: 0, kind: input, shape index: {}]
  %s1 = inlined_call_operand.vmem [shape: s32[8], index: 1, kind: output, shape index: {}]
  $region1: #{eq.1} parent=0
    #allocation0 [shape = 'u8[4096]{0}', space=vmem, size = 0x1000, scoped, tag = 'scoped mem for output reshape']
    #allocation1 [shape = 'u8[4096]{0}', space=vmem, size = 0x1000, scoped, tag = 'scoped mem for input reshape']
    %s3 = ssub.s32 4, 1
    %v4 = vld [vmem:[%s0] sm:%s3]
    %5 = vst [vmem:[#allocation1] sm:%s3] %v4
    %v6 = vld [vmem:[#allocation1] sm:$0x1]
    %vm7 = vcmask 31744
    %8 = vst.msk [vmem:[#allocation0] sm:$0x1] %vm7, %v6
    %s9 = scalar_lea.vmem [#allocation1], 1
    %v10 = vld [vmem:[%s9] sm:$0x1]
    %11 = vrot.lane.b32.xlu0 %v10, 4
    %v12 = vpop.permute.xlu0 %11
    %vm13 = vcmask 64544
    %14 = vst.msk [vmem:[#allocation0] sm:$0x1] %vm13, %v12
    %s16 = ssub.s32 2, 1
    %v17 = vld [vmem:[#allocation0] sm:%s16]
    %s19 = ssub.s32 2, 1
    %20 = vst [vmem:[%s1] sm:%s19] %v17

// kernel: _forward_impl.1
$region0: #{_forward_impl.1}
  #allocation0 [shape = 'u32[]', space=smem, size = 0x4, offset = 0x4, fixed_abs, tag = 'smem constant byte address 0x4 - core index']
  #allocation1 [shape = 'u32[72,128]{1,0:T(1,128)}', space=vmem, size = 0x9000, scoped, tag = 'internal scratch']
  %s0 = inlined_call_operand.vmem [shape: bf16[16,12], index: 0, kind: input, shape index: {}]
  %s1 = inlined_call_operand.vmem [shape: bf16[16,16], index: 1, kind: input, shape index: {}]
  %s2 = inlined_call_operand.vmem [shape: bf16[10,16], index: 2, kind: input, shape index: {}]
  %s3 = inlined_call_operand.vmem [shape: f32[8,1], index: 3, kind: input, shape index: {}]
  %s4 = inlined_call_operand.vmem [shape: bf16[4,8], index: 4, kind: input, shape index: {}]
  %s5 = inlined_call_operand.vmem [shape: f32[2,3], index: 5, kind: input, shape index: {}]
  %s6 = inlined_call_operand.vmem [shape: bf16[12,32], index: 6, kind: input, shape index: {}]
  %s7 = inlined_call_operand.vmem [shape: f32[1,32], index: 7, kind: input, shape index: {}]
  %s8 = inlined_call_operand.vmem [shape: bf16[3,32,32], index: 8, kind: input, shape index: {}]
  %s9 = inlined_call_operand.vmem [shape: f32[3,1,32], index: 9, kind: input, shape index: {}]
  %s10 = inlined_call_operand.vmem [shape: bf16[32,48], index: 10, kind: input, shape index: {}]
  %s11 = inlined_call_operand.vmem [shape: f32[1,48], index: 11, kind: input, shape index: {}]
  %s12 = inlined_call_operand.vmem [shape: bf16[32,2], index: 12, kind: input, shape index: {}]
  %s13 = inlined_call_operand.vmem [shape: f32[1,2], index: 13, kind: input, shape index: {}]
  %s14 = inlined_call_operand.vmem [shape: f32[8,128], index: 14, kind: output, shape index: {}]
  %s15 = sld [smem:[#allocation0]]
  $region66: #{_forward_impl.1} parent=0
    _
  %s17 = ssub.s32 1, %s15
  %s18 = scalar_select 0, %s17, %s15
  // Predicated region
  $region2: #{_forward_impl.1} parent=0 // pred_check
    _
  $region3: #{_forward_impl.1} parent=0 // pred_check_branch
    %20 = sbr.rel (0) target = $region5
  $region4: #{_forward_impl.1} parent=0 // pred_region
    _
  $region5: #{_forward_impl.1} parent=0 // pred_fallthru
    _
  // Predicated region
  $region6: #{_forward_impl.1} parent=0 // pred_check
    _
  $region7: #{_forward_impl.1} parent=0 // pred_check_branch
    %22 = sbr.rel (0) target = $region9
  $region8: #{_forward_impl.1} parent=0 // pred_region
    _
  $region9: #{_forward_impl.1} parent=0 // pred_fallthru
    _
  // Predicated region
  $region10: #{_forward_impl.1} parent=0 // pred_check
    _
  $region11: #{_forward_impl.1} parent=0 // pred_check_branch
    %24 = sbr.rel (0) target = $region13
  $region12: #{_forward_impl.1} parent=0 // pred_region
    _
  $region13: #{_forward_impl.1} parent=0 // pred_fallthru
    _
  // Predicated region
  $region14: #{_forward_impl.1} parent=0 // pred_check
    _
  $region15: #{_forward_impl.1} parent=0 // pred_check_branch
    %26 = sbr.rel (0) target = $region17
  $region16: #{_forward_impl.1} parent=0 // pred_region
    _
  $region17: #{_forward_impl.1} parent=0 // pred_fallthru
    _
  // Predicated region
  $region18: #{_forward_impl.1} parent=0 // pred_check
    _
  $region19: #{_forward_impl.1} parent=0 // pred_check_branch
    %28 = sbr.rel (0) target = $region21
  $region20: #{_forward_impl.1} parent=0 // pred_region
    _
  $region21: #{_forward_impl.1} parent=0 // pred_fallthru
    _
  // Predicated region
  $region22: #{_forward_impl.1} parent=0 // pred_check
    _
  $region23: #{_forward_impl.1} parent=0 // pred_check_branch
    %30 = sbr.rel (0) target = $region25
  $region24: #{_forward_impl.1} parent=0 // pred_region
    _
  $region25: #{_forward_impl.1} parent=0 // pred_fallthru
    _
  // Predicated region
  $region26: #{_forward_impl.1} parent=0 // pred_check
    _
  $region27: #{_forward_impl.1} parent=0 // pred_check_branch
    %32 = sbr.rel (0) target = $region29
  $region28: #{_forward_impl.1} parent=0 // pred_region
    _
  $region29: #{_forward_impl.1} parent=0 // pred_fallthru
    _
  // Predicated region
  $region30: #{_forward_impl.1} parent=0 // pred_check
    _
  $region31: #{_forward_impl.1} parent=0 // pred_check_branch
    %34 = sbr.rel (0) target = $region33
  $region32: #{_forward_impl.1} parent=0 // pred_region
    _
  $region33: #{_forward_impl.1} parent=0 // pred_fallthru
    _
  // Predicated region
  $region34: #{_forward_impl.1} parent=0 // pred_check
    _
  $region35: #{_forward_impl.1} parent=0 // pred_check_branch
    %36 = sbr.rel (0) target = $region37
  $region36: #{_forward_impl.1} parent=0 // pred_region
    _
  $region37: #{_forward_impl.1} parent=0 // pred_fallthru
    _
  // Predicated region
  $region38: #{_forward_impl.1} parent=0 // pred_check
    _
  $region39: #{_forward_impl.1} parent=0 // pred_check_branch
    %38 = sbr.rel (0) target = $region41
  $region40: #{_forward_impl.1} parent=0 // pred_region
    _
  $region41: #{_forward_impl.1} parent=0 // pred_fallthru
    _
  // Predicated region
  $region42: #{_forward_impl.1} parent=0 // pred_check
    _
  $region43: #{_forward_impl.1} parent=0 // pred_check_branch
    %40 = sbr.rel (0) target = $region45
  $region44: #{_forward_impl.1} parent=0 // pred_region
    _
  $region45: #{_forward_impl.1} parent=0 // pred_fallthru
    _
  // Predicated region
  $region46: #{_forward_impl.1} parent=0 // pred_check
    _
  $region47: #{_forward_impl.1} parent=0 // pred_check_branch
    %42 = sbr.rel (0) target = $region49
  $region48: #{_forward_impl.1} parent=0 // pred_region
    _
  $region49: #{_forward_impl.1} parent=0 // pred_fallthru
    _
  // Predicated region
  $region50: #{_forward_impl.1} parent=0 // pred_check
    _
  $region51: #{_forward_impl.1} parent=0 // pred_check_branch
    %44 = sbr.rel (0) target = $region53
  $region52: #{_forward_impl.1} parent=0 // pred_region
    _
  $region53: #{_forward_impl.1} parent=0 // pred_fallthru
    _
  // Predicated region
  $region54: #{_forward_impl.1} parent=0 // pred_check
    _
  $region55: #{_forward_impl.1} parent=0 // pred_check_branch
    %46 = sbr.rel (0) target = $region57
  $region56: #{_forward_impl.1} parent=0 // pred_region
    _
  $region57: #{_forward_impl.1} parent=0 // pred_fallthru
    _
  %v48 = vld [vmem:[%s1] sm:$0xf]
  %v49 = vld [vmem:[%s1 + $0x4] sm:$0xf]
  %v50 = vld [vmem:[%s0] sm:$0xf]
  %v51 = vld [vmem:[%s0 + $0x4] sm:$0xf]
  %v52 = vld [vmem:[%s6] sm:$0xf]
  %v53 = vld [vmem:[%s6 + $0x4] sm:$0x3]
  %v54 = vld [vmem:[%s7] sm:$0x1]
  %v56 = vperm.slane %v54, 0
  %v60 = vunpack.c.l.b16 %v50
  %v61 = vunpack.c.l.b16 %v51
  %v62 = vpack.c.b16 %v61, %v60
  %v65 = vunpack.c.l.b16 %v52
  %v66 = vunpack.c.l.b16 %v53
  %v67 = vpack.c.b16 %v66, %v65
  %vm68 = vcmask 97280
  %v70 = vsel %vm68, %v62, 0
  %vm72 = vcmask 1045504
  %v74 = vsel %vm72, %v67, 0
  %76 = vmatpush.bf16.msra.mxu0 0
  %77 = vmatpush.bf16.msra.mxu0 0
  %78 = vmatpush.bf16.msra.mxu0 0
  %79 = vmatpush.bf16.msra.mxu0 0
  %80 = vmatpush.bf16.msra.mxu0 0
  %81 = vmatpush.bf16.msra.mxu0 0
  %82 = vmatpush.bf16.msra.mxu0 0
  %83 = vmatpush.bf16.msra.mxu0 %v74
  %84 = vmatmul.bf16.gmra.mxu0 %v70
  %v85 = vpop.f32.mrf.mxu0
  %v86 = vadd.f32 %v56, %v85
  %v87 = vpop.f32.mrf.mxu0
  %v88 = vadd.f32 %v56, %v87
  %89 = vdwg.mxu0
  %v90 = vmax.f32 %v86, 0.0
  %v91 = vmax.f32 %v88, 0.0
  %v92 = vpack.c.bf16 %v91, %v90
  %v95 = vunpack.c.l.b16 %v48
  %v96 = vunpack.c.l.b16 %v49
  %v97 = vpack.c.b16 %v96, %v95
  %vm98 = vcmask 130048
  %v100 = vsel %vm98, %v97, 0
  %102 = vmatpush.bf16.msra.mxu0 0
  %103 = vmatpush.bf16.msra.mxu0 0
  %104 = vmatpush.bf16.msra.mxu0 0
  %105 = vmatpush.bf16.msra.mxu0 0
  %106 = vmatpush.bf16.msra.mxu0 0
  %107 = vmatpush.bf16.msra.mxu0 0
  %108 = vmatpush.bf16.msra.mxu0 0
  %109 = vmatpush.bf16.msra.mxu0 %v92
  %110 = vmatmul.bf16.gmra.mxu0 %v100
  %v111 = vpop.f32.mrf.mxu0
  %v112 = vadd.f32 0.0, %v111
  %v113 = vpop.f32.mrf.mxu0
  %v114 = vadd.f32 0.0, %v113
  %115 = vdwg.mxu0
  %v116 = vpack.c.bf16 %v114, %v112
  %v117 = vld [vmem:[%s8] sm:$0xf]
  %v118 = vld [vmem:[%s8 + $0x4] sm:$0xf]
  %v119 = vld [vmem:[%s8 + $0x8] sm:$0xf]
  %v120 = vld [vmem:[%s8 + $0xc] sm:$0xf]
  %v121 = vld [vmem:[%s9] sm:$0x1]
  %v123 = vperm.slane %v121, 0
  %v129 = vunpack.c.l.b16 %v117
  %v130 = vunpack.c.l.b16 %v118
  %v131 = vunpack.c.l.b16 %v119
  %v132 = vunpack.c.l.b16 %v120
  %v133 = vpack.c.b16 %v130, %v129
  %v134 = vpack.c.b16 %v132, %v131
  %vm137 = vcmask 261120
  %v139 = vsel %vm137, %v116, 0
  %141 = vmatpush.bf16.msra.mxu0 0
  %142 = vmatpush.bf16.msra.mxu0 0
  %143 = vmatpush.bf16.msra.mxu0 0
  %144 = vmatpush.bf16.msra.mxu0 0
  %145 = vmatpush.bf16.msra.mxu0 0
  %146 = vmatpush.bf16.msra.mxu0 0
  %147 = vmatpush.bf16.msra.mxu0 %v134
  %148 = vmatpush.bf16.msra.mxu0 %v133
  %149 = vmatmul.bf16.gmra.mxu0 %v139
  %v150 = vpop.f32.mrf.mxu0
  %v151 = vadd.f32 %v123, %v150
  %v152 = vpop.f32.mrf.mxu0
  %v153 = vadd.f32 %v123, %v152
  %154 = vdwg.mxu0
  %v155 = vmax.f32 %v151, 0.0
  %v156 = vmax.f32 %v153, 0.0
  %v157 = vpack.c.bf16 %v156, %v155
  %158 = vmatpush.bf16.msra.mxu0 0
  %159 = vmatpush.bf16.msra.mxu0 0
  %160 = vmatpush.bf16.msra.mxu0 0
  %161 = vmatpush.bf16.msra.mxu0 0
  %162 = vmatpush.bf16.msra.mxu0 0
  %163 = vmatpush.bf16.msra.mxu0 0
  %164 = vmatpush.bf16.msra.mxu0 0
  %165 = vmatpush.bf16.msra.mxu0 %v157
  %166 = vmatmul.bf16.gmra.mxu0 %v100
  %v167 = vpop.f32.mrf.mxu0
  %v168 = vadd.f32 0.0, %v167
  %v169 = vpop.f32.mrf.mxu0
  %v170 = vadd.f32 0.0, %v169
  %171 = vdwg.mxu0
  %v172 = vpack.c.bf16 %v170, %v168
  %s173 = scalar_lea.vmem %s8, 16
  %v174 = vld [vmem:[%s173] sm:$0xf]
  %v175 = vld [vmem:[%s173 + $0x4] sm:$0xf]
  %v176 = vld [vmem:[%s173 + $0x8] sm:$0xf]
  %v177 = vld [vmem:[%s173 + $0xc] sm:$0xf]
  %s178 = scalar_lea.vmem %s9, 1
  %v179 = vld [vmem:[%s178] sm:$0x1]
  %v181 = vperm.slane %v179, 0
  %v187 = vunpack.c.l.b16 %v174
  %v188 = vunpack.c.l.b16 %v175
  %v189 = vunpack.c.l.b16 %v176
  %v190 = vunpack.c.l.b16 %v177
  %v191 = vpack.c.b16 %v188, %v187
  %v192 = vpack.c.b16 %v190, %v189
  %v196 = vsel %vm137, %v172, 0
  %198 = vmatpush.bf16.msra.mxu0 0
  %199 = vmatpush.bf16.msra.mxu0 0
  %200 = vmatpush.bf16.msra.mxu0 0
  %201 = vmatpush.bf16.msra.mxu0 0
  %202 = vmatpush.bf16.msra.mxu0 0
  %203 = vmatpush.bf16.msra.mxu0 0
  %204 = vmatpush.bf16.msra.mxu0 %v192
  %205 = vmatpush.bf16.msra.mxu0 %v191
  %206 = vmatmul.bf16.gmra.mxu0 %v196
  %v207 = vpop.f32.mrf.mxu0
  %v208 = vadd.f32 %v181, %v207
  %v209 = vpop.f32.mrf.mxu0
  %v210 = vadd.f32 %v181, %v209
  %211 = vdwg.mxu0
  %v212 = vmax.f32 %v208, 0.0
  %v213 = vmax.f32 %v210, 0.0
  %v214 = vpack.c.bf16 %v213, %v212
  %215 = vmatpush.bf16.msra.mxu0 0
  %216 = vmatpush.bf16.msra.mxu0 0
  %217 = vmatpush.bf16.msra.mxu0 0
  %218 = vmatpush.bf16.msra.mxu0 0
  %219 = vmatpush.bf16.msra.mxu0 0
  %220 = vmatpush.bf16.msra.mxu0 0
  %221 = vmatpush.bf16.msra.mxu0 0
  %222 = vmatpush.bf16.msra.mxu0 %v214
  %223 = vmatmul.bf16.gmra.mxu0 %v100
  %v224 = vpop.f32.mrf.mxu0
  %v225 = vadd.f32 0.0, %v224
  %v226 = vpop.f32.mrf.mxu0
  %v227 = vadd.f32 0.0, %v226
  %228 = vdwg.mxu0
  %v229 = vpack.c.bf16 %v227, %v225
  %s230 = scalar_lea.vmem %s8, 32
  %v231 = vld [vmem:[%s230] sm:$0xf]
  %v232 = vld [vmem:[%s230 + $0x4] sm:$0xf]
  %v233 = vld [vmem:[%s230 + $0x8] sm:$0xf]
  %v234 = vld [vmem:[%s230 + $0xc] sm:$0xf]
  %s235 = scalar_lea.vmem %s9, 2
  %v236 = vld [vmem:[%s235] sm:$0x1]
  %v238 = vperm.slane %v236, 0
  %v244 = vunpack.c.l.b16 %v231
  %v245 = vunpack.c.l.b16 %v232
  %v246 = vunpack.c.l.b16 %v233
  %v247 = vunpack.c.l.b16 %v234
  %v248 = vpack.c.b16 %v245, %v244
  %v249 = vpack.c.b16 %v247, %v246
  %v253 = vsel %vm137, %v229, 0
  %255 = vmatpush.bf16.msra.mxu0 0
  %256 = vmatpush.bf16.msra.mxu0 0
  %257 = vmatpush.bf16.msra.mxu0 0
  %258 = vmatpush.bf16.msra.mxu0 0
  %259 = vmatpush.bf16.msra.mxu0 0
  %260 = vmatpush.bf16.msra.mxu0 0
  %261 = vmatpush.bf16.msra.mxu0 %v249
  %262 = vmatpush.bf16.msra.mxu0 %v248
  %263 = vmatmul.bf16.gmra.mxu0 %v253
  %v264 = vpop.f32.mrf.mxu0
  %v265 = vadd.f32 %v238, %v264
  %v266 = vpop.f32.mrf.mxu0
  %v267 = vadd.f32 %v238, %v266
  %268 = vdwg.mxu0
  %v269 = vmax.f32 %v265, 0.0
  %v270 = vmax.f32 %v267, 0.0
  %v271 = vld [vmem:[%s2] sm:$0xf]
  %v272 = vld [vmem:[%s2 + $0x4] sm:$0x1]
  %v273 = vpack.c.bf16 %v270, %v269
  %v276 = vunpack.c.l.b16 %v271
  %v277 = vunpack.c.l.b16 %v272
  %v278 = vpack.c.b16 %v277, %v276
  %v280 = vsel %vm98, %v278, 0
  %282 = vmatpush.bf16.msra.mxu0 0
  %283 = vmatpush.bf16.msra.mxu0 0
  %284 = vmatpush.bf16.msra.mxu0 0
  %285 = vmatpush.bf16.msra.mxu0 0
  %286 = vmatpush.bf16.msra.mxu0 0
  %287 = vmatpush.bf16.msra.mxu0 0
  %288 = vmatpush.bf16.msra.mxu0 0
  %289 = vmatpush.bf16.msra.mxu0 %v273
  %290 = vmatmul.bf16.gmra.mxu0 %v280
  %v291 = vpop.f32.mrf.mxu0
  %v292 = vadd.f32 0.0, %v291
  %v293 = vpop.f32.mrf.mxu0
  %v294 = vadd.f32 0.0, %v293
  %295 = vdwg.mxu0
  %v296 = vpack.c.bf16 %v294, %v292
  %v297 = vld [vmem:[%s10] sm:$0xf]
  %v298 = vld [vmem:[%s10 + $0x4] sm:$0xf]
  %v299 = vld [vmem:[%s10 + $0x8] sm:$0xf]
  %v300 = vld [vmem:[%s10 + $0xc] sm:$0xf]
  %v301 = vld [vmem:[%s11] sm:$0x1]
  %v303 = vperm.slane %v301, 0
  %v309 = vunpack.c.l.b16 %v297
  %v310 = vunpack.c.l.b16 %v298
  %v311 = vunpack.c.l.b16 %v299
  %v312 = vunpack.c.l.b16 %v300
  %v313 = vpack.c.b16 %v310, %v309
  %v314 = vpack.c.b16 %v312, %v311
  %v318 = vsel %vm137, %v296, 0
  %320 = vmatpush.bf16.msra.mxu0 0
  %321 = vmatpush.bf16.msra.mxu0 0
  %322 = vmatpush.bf16.msra.mxu0 0
  %323 = vmatpush.bf16.msra.mxu0 0
  %324 = vmatpush.bf16.msra.mxu0 0
  %325 = vmatpush.bf16.msra.mxu0 0
  %326 = vmatpush.bf16.msra.mxu0 %v314
  %327 = vmatpush.bf16.msra.mxu0 %v313
  %328 = vmatmul.bf16.gmra.mxu0 %v318
  %v329 = vpop.f32.mrf.mxu0
  %v330 = vadd.f32 %v303, %v329
  %v331 = vpop.f32.mrf.mxu0
  %v332 = vadd.f32 %v303, %v331
  %333 = vdwg.mxu0
  %v334 = vxor.u32 %v330, 2147483648
  %v335 = vmul.f32 %v334, 1.442695
  %v336 = vpow.pop %v335
  %v337 = vadd.f32 %v336, 1.0
  %v338 = vrcp.pop %v337
  %v339 = vmul.f32 %v337, %v338
  %v340 = vsub.f32 1.0, %v339
  %v341 = vmul.f32 %v338, %v340
  %v342 = vadd.f32 %v338, %v341
  %vm343 = vweird.f32 %v337
  %vm344 = vweird.f32 %v338
  %vm345 = vmor %vm343, %vm344
  %v346 = vsel %vm345, %v338, %v342
  %v347 = vand.u32 2147483647, %v337
  %vm348 = vcmp.eq.f32.partialorder %v347, 8.507059e+37
  %v349 = vand.u32 %v337, 2147483648
  %v350 = vor.u32 1.1754944e-38, %v349
  %v351 = vsel %vm348, %v350, %v346
  %v352 = vmul.f32 1.0, %v351
  %v353 = vld [vmem:[%s3] sm:$0xff]
  %355 = vset.pattern.permute.xlu0 0
  %356 = vperm.xlu0 %355, %v353
  %v357 = vpop.permute.xlu0 %356
  %v359 = vmul.f32 %v352, %v357
  %vm360 = vcmask 123968
  %v361 = vsel %vm360, %v332, -inf
  %362 = vmax.xlane.f32.xlu0 %v361
  %v363 = vpop.xlane.xlu0 %362
  %v364 = vsub.f32 %v332, %v363
  %v365 = vmul.f32 %v364, 1.442695
  %v366 = vpow.pop %v365
  %368 = vrot.lane.b32.xlu0 %v366, 120
  %v369 = vpop.permute.xlu0 %368
  %vm371 = vcmask 58368
  %v372 = vsel %vm371, %v369, 0.0
  %373 = vadd.xlane.f32.xlu0 %v372
  %v374 = vpop.xlane.xlu0 %373
  %v375 = vrcp.pop %v374
  %v376 = vmul.f32 %v366, %v375
  %v377 = vmax.f32 %v332, 0.0
  %v378 = vpack.c.bf16 %v377, %v377
  %v379 = vld [vmem:[%s12] sm:$0xf]
  %v380 = vld [vmem:[%s12 + $0x4] sm:$0xf]
  %v381 = vld [vmem:[%s12 + $0x8] sm:$0xf]
  %v382 = vld [vmem:[%s12 + $0xc] sm:$0xf]
  %v383 = vld [vmem:[%s13] sm:$0x1]
  %v385 = vperm.slane %v383, 0
  %388 = vrot.lane.b32.xlu0 %v378, 112
  %v389 = vpop.permute.xlu0 %388
  %v394 = vunpack.c.l.b16 %v379
  %v395 = vunpack.c.l.b16 %v380
  %v396 = vunpack.c.l.b16 %v381
  %v397 = vunpack.c.l.b16 %v382
  %v398 = vpack.c.b16 %v395, %v394
  %v399 = vpack.c.b16 %v397, %v396
  %v403 = vsel %vm137, %v389, 0
  %405 = vmatpush.bf16.msra.mxu0 0
  %406 = vmatpush.bf16.msra.mxu0 0
  %407 = vmatpush.bf16.msra.mxu0 0
  %408 = vmatpush.bf16.msra.mxu0 0
  %409 = vmatpush.bf16.msra.mxu0 0
  %410 = vmatpush.bf16.msra.mxu0 0
  %411 = vmatpush.bf16.msra.mxu0 %v399
  %412 = vmatpush.bf16.msra.mxu0 %v398
  %413 = vmatmul.bf16.gmra.mxu0 %v403
  %v414 = vpop.f32.mrf.mxu0
  %v415 = vadd.f32 %v385, %v414
  %v416 = vpop.f32.mrf.mxu0
  %417 = vdwg.mxu0
  %v418 = vld [vmem:[%s4] sm:$0x3]
  %v419 = vpack.c.bf16 %v359, %v359
  %vm420 = vcmask 64512
  %v422 = vsel %vm420, %v418, 0
  %vm424 = vcmask 1043456
  %v426 = vsel %vm424, %v419, 0
  %428 = vmatpush.bf16.msra.mxu0 0
  %429 = vmatpush.bf16.msra.mxu0 0
  %430 = vmatpush.bf16.msra.mxu0 0
  %431 = vmatpush.bf16.msra.mxu0 0
  %432 = vmatpush.bf16.msra.mxu0 0
  %433 = vmatpush.bf16.msra.mxu0 0
  %434 = vmatpush.bf16.msra.mxu0 0
  %435 = vmatpush.bf16.msra.mxu0 %v426
  %436 = vmatmul.bf16.gmra.mxu0 %v422
  %v437 = vpop.f32.mrf.mxu0
  %v438 = vadd.f32 0.0, %v437
  %v439 = vpop.f32.mrf.mxu0
  %440 = vdwg.mxu0
  %v441 = vld [vmem:[%s5] sm:$0x3]
  %v443 = vrot.slane %v438, 2
  %v445 = vmin.f32 %v438, %v443
  %v446 = vmax.f32 %v438, %v443
  %v447 = vsub.f32 1.0, %v438
  %449 = vset.pattern.permute.xlu0 0
  %450 = vperm.xlu0 %449, %v441
  %v451 = vpop.permute.xlu0 %450
  %v453 = vmul.f32 %v451, %v445
  %454 = vset.pattern.permute.xlu0 1
  %455 = vperm.xlu0 %454, %v441
  %v456 = vpop.permute.xlu0 %455
  %v458 = vmul.f32 %v456, %v446
  %v459 = vadd.f32 %v453, %v458
  %460 = vset.pattern.permute.xlu0 2
  %461 = vperm.xlu0 %460, %v441
  %v462 = vpop.permute.xlu0 %461
  %v464 = vmul.f32 %v462, %v447
  %v465 = vadd.f32 %v459, %v464
  %v466 = vlaneseq
  %v467 = vshrl.u32 %v466, 7
  %v468 = vlaneseq
  %v469 = vand.u32 %v468, 127
  %vm470 = vcmp.ge.s32.totalorder %v469, %v467
  %v472 = vrot.slane %v465, 1
  %v473 = vsel %vm470, 1, 0
  %vm474 = vcmp.eq.s32.totalorder %v473, 1
  %v475 = vperm.slane %v465, 0
  %v476 = vperm.slane %v472, 0
  %v479 = vsel %vm474, %v475, 1e+30
  %v480 = vsel %vm474, %v476, 1e+30
  %v481 = vsel %vm420, %v479, inf
  %482 = vmin.xlane.f32.xlu0 %v481
  %v483 = vpop.xlane.xlu0 %482
  %v484 = vsel %vm420, %v480, inf
  %485 = vmin.xlane.f32.xlu0 %v484
  %v486 = vpop.xlane.xlu0 %485
  %v489 = vadd.s32 %v469, 4294967288
  %v490 = vperm.slane %v483, %v489
  %v491 = vperm.slane %v486, %v489
  %vm492 = vcmask 1041409
  %v493 = vsel %vm492, %v491, %v490
  %v495 = vmul.f32 %v376, %v493
  %497 = vrot.lane.b32.xlu0 %v495, 120
  %v498 = vpop.permute.xlu0 %497
  %v500 = vsel %vm371, %v498, 0.0
  %501 = vadd.xlane.f32.xlu0 %v500
  %v502 = vpop.xlane.xlu0 %501
  %504 = vrot.lane.b32.xlu0 %v376, 120
  %v505 = vpop.permute.xlu0 %504
  %508 = vrot.lane.b32.xlu0 %v415, 8
  %v509 = vpop.permute.xlu0 %508
  %v511 = vsel %vm420, %v505, %v509
  %vm512 = vcmask 80896
  %v513 = vsel %vm512, %v511, %v502
  %vm514 = vcmask 1041408
  %v515 = vsel %vm514, %v513, 0.0
  %517 = vrot.lane.b32.xlu0 %v515, 8
  %v518 = vpop.permute.xlu0 %517
  %v520 = vsel %vm420, %v359, %v518
  %vm521 = vcmask 154624
  %v522 = vsel %vm521, %v520, 0.0
  %523 = vst [vmem:[%s14] sm:$0xff] %v522
  // Predicated region
  $region58: #{_forward_impl.1} parent=0 // pred_check
    _
  $region59: #{_forward_impl.1} parent=0 // pred_check_branch
    %525 = sbr.rel (0) target = $region61
  $region60: #{_forward_impl.1} parent=0 // pred_region
    _
  $region61: #{_forward_impl.1} parent=0 // pred_fallthru
    _
  // Predicated region
  $region62: #{_forward_impl.1} parent=0 // pred_check
    _
  $region63: #{_forward_impl.1} parent=0 // pred_check_branch
    %527 = sbr.rel (0) target = $region65
  $region64: #{_forward_impl.1} parent=0 // pred_region
    _
  $region65: #{_forward_impl.1} parent=0 // pred_fallthru
    _

</llo_original>
